<compile_context>
chip_gen: v7x
topology: tpu7x:2x2x1
jax: 0.10.0
libtpu: 0.0.40
codegen_flags: <defaults>
</compile_context>

<pallas_src>
import math
import functools

import jax
import jax.numpy as jnp
from jax.experimental import pallas as pl
from jax.experimental.pallas import tpu as pltpu


# ----------------------------- kernels ------------------------------------


def _pe_add_kernel(x_ref, pe_ref, o_ref):
    # x_ref: (tS, B, D), pe_ref: (tS, D) — same dtype (cast hoisted to wrapper)
    o_ref[...] = x_ref[...] + pe_ref[...][:, None, :]


def _pe_add_dropout_kernel(x_ref, pe_ref, bits_ref, o_ref, *, p):
    # bits_ref: (tS, B, D) uint32 random bits (precomputed in the wrapper)
    y = x_ref[...] + pe_ref[...][:, None, :]
    threshold = jnp.uint32(min(int(p * (2.0 ** 32)), 2 ** 32 - 1))
    keep = bits_ref[...] >= threshold          # keep with prob 1 - p
    scale = jnp.asarray(1.0 / (1.0 - p), dtype=y.dtype)
    o_ref[...] = jnp.where(keep, y * scale, jnp.zeros_like(y))


# --------------------------- parameter setup -------------------------------


def make_pe_table(d_model, max_len=5000, dtype=jnp.float32):
    """Deterministic positional-encoding buffer, shape (max_len, d_model)."""
    position = jnp.arange(max_len, dtype=jnp.float32)[:, None]          # (L, 1)
    div_term = jnp.exp(
        jnp.arange(0, d_model, 2, dtype=jnp.float32)
        * -(math.log(10000.0) / d_model)
    )                                                                    # (D/2,)
    pe = jnp.zeros((max_len, d_model), dtype=jnp.float32)
    pe = pe.at[:, 0::2].set(jnp.sin(position * div_term))
    pe = pe.at[:, 1::2].set(jnp.cos(position * div_term))
    return pe.astype(dtype)


# --------------------------- tiling helpers ---------------------------------

# Conservative per-step VMEM budget so double-buffered tiles fit the default
# scoped VMEM on every generation (v5e 16 MiB, v6e 32 MiB, v7x 32 MiB of 64).
_VMEM_TILE_BUDGET = 8 * 1024 * 1024


def _choose_seq_tile(S, B, D, itemsize, n_big):
    """Largest seq-tile (multiple of 8, divides S) whose double-buffered
    working set (n_big full-width tiles + one pe tile) fits the budget."""
    for cand in (1024, 512, 256, 128, 64, 32, 16, 8):
        if cand <= S and S % cand == 0:
            per_step = 2 * cand * (n_big * B * D * itemsize + D * itemsize)
            if per_step <= _VMEM_TILE_BUDGET:
                return cand
    return S  # tiny / awkward S: fall back to a single whole block


# ------------------------------- wrapper ------------------------------------


def positional_encoding(x, pe, *, p=0.1, train=False, seed=0):
    """x: (S, B, D); pe: (max_len, D).  Returns (S, B, D)."""
    S, B, D = x.shape
    itemsize = jnp.dtype(x.dtype).itemsize
    # slice + dtype-cast hoisted out of the kernel (done once, in plain JAX)
    pe_s = pe[:S].astype(x.dtype)                                       # (S, D)

    compiler_params = pltpu.CompilerParams(
        dimension_semantics=("parallel",),       # megacore sharding on v7x
        vmem_limit_bytes=32 * 1024 * 1024,
    )
    # NOTE: input_output_aliases={0: 0} would make this in-place, but at
    # eager top-level (no donated args) it only triggers a donation warning,
    # so it is intentionally left to callers running under jit+donate.

    if (not train) or p <= 0.0:
        # eval mode: dropout is identity -> just the broadcast add
        tS = _choose_seq_tile(S, B, D, itemsize, n_big=2)   # x tile + out tile
        return pl.pallas_call(
            _pe_add_kernel,
            out_shape=jax.ShapeDtypeStruct((S, B, D), x.dtype),
            grid=(S // tS,),
            in_specs=[
                pl.BlockSpec((tS, B, D), lambda i: (i, 0, 0)),
                pl.BlockSpec((tS, D), lambda i: (i, 0)),
            ],
            out_specs=pl.BlockSpec((tS, B, D), lambda i: (i, 0, 0)),
            compiler_params=compiler_params,
        )(x, pe_s)

    # training mode: inverted dropout with host-generated random bits
    # (deterministic per seed; not bit-identical to torch's RNG stream).
    bits = jax.random.bits(jax.random.PRNGKey(seed), (S, B, D), dtype=jnp.uint32)
    tS = _choose_seq_tile(S, B, D, max(itemsize, 4), n_big=3)  # x + bits + out
    return pl.pallas_call(
        functools.partial(_pe_add_dropout_kernel, p=p),
        out_shape=jax.ShapeDtypeStruct((S, B, D), x.dtype),
        grid=(S // tS,),
        in_specs=[
            pl.BlockSpec((tS, B, D), lambda i: (i, 0, 0)),
            pl.BlockSpec((tS, D), lambda i: (i, 0)),
            pl.BlockSpec((tS, B, D), lambda i: (i, 0, 0)),
        ],
        out_specs=pl.BlockSpec((tS, B, D), lambda i: (i, 0, 0)),
        compiler_params=compiler_params,
    )(x, pe_s, bits)


# --------------------------------- main -------------------------------------


if __name__ == "__main__":
    d_model = 32
    seq_len = 8
    batch = 2
    max_len = 5000
    p_drop = 0.1

    key = jax.random.PRNGKey(0)
    x = jax.random.normal(key, (seq_len, batch, d_model), dtype=jnp.float32)
    pe = make_pe_table(d_model, max_len=max_len, dtype=jnp.float32)

    # eval-mode path (dropout = identity): check against pure-JAX reference
    out_eval = jax.block_until_ready(positional_encoding(x, pe, p=p_drop, train=False))
    ref = x + pe[:seq_len][:, None, :]
    assert out_eval.shape == (seq_len, batch, d_model)
    assert jnp.allclose(out_eval, ref, atol=1e-6, rtol=1e-6), "mismatch vs reference"

    # training-mode path: every element must be either dropped (0) or the
    # reference value scaled by 1/(1-p)
    out_train = jax.block_until_ready(
        positional_encoding(x, pe, p=p_drop, train=True, seed=0))
    assert out_train.shape == (seq_len, batch, d_model)
    scaled = ref / (1.0 - p_drop)
    ok = (jnp.abs(out_train) < 1e-12) | (jnp.abs(out_train - scaled) < 1e-4)
    assert bool(jnp.all(ok)), "dropout output is neither 0 nor scaled reference"

    # larger shape exercising the multi-step pipelined grid (tS=512, grid=(4,))
    S2, B2, D2 = 2048, 4, 128
    x2 = jax.random.normal(jax.random.PRNGKey(1), (S2, B2, D2), dtype=jnp.float32)
    pe2 = make_pe_table(D2, max_len=4096, dtype=jnp.float32)
    out2 = jax.block_until_ready(positional_encoding(x2, pe2, p=p_drop, train=False))
    ref2 = x2 + pe2[:S2][:, None, :]
    assert jnp.allclose(out2, ref2, atol=1e-6, rtol=1e-6), "tiled path mismatch"

    print("KERNEL_OK")
</pallas_src>

<mosaic_0001>
module attributes {stable_mosaic.version = 11 : i64} {
  func.func @_pe_add_kernel(%arg0: i32, %arg1: memref<8x2x32xf32, #tpu.memory_space<vmem>>, %arg2: memref<8x32xf32, #tpu.memory_space<vmem>>, %arg3: memref<8x2x32xf32, #tpu.memory_space<vmem>>) attributes {dimension_semantics = [#tpu.dimension_semantics<parallel>], iteration_bounds = array<i64: 1>, scalar_prefetch = 0 : i64, scratch_operands = 0 : i64, tpu.core_type = #tpu.core_type<tc>, window_params = [{transform_indices = @transform_0, window_bounds = array<i64: 8, 2, 32>}, {transform_indices = @transform_1, window_bounds = array<i64: 8, 32>}, {transform_indices = @transform_2, window_bounds = array<i64: 8, 2, 32>}]} {
    %c0 = arith.constant 0 : index
    %c0_0 = arith.constant 0 : index
    %c0_1 = arith.constant 0 : index
    %0 = vector.load %arg1[%c0, %c0_0, %c0_1] : memref<8x2x32xf32, #tpu.memory_space<vmem>>, vector<8x2x32xf32>
    %c0_2 = arith.constant 0 : index
    %c0_3 = arith.constant 0 : index
    %1 = vector.load %arg2[%c0_2, %c0_3] : memref<8x32xf32, #tpu.memory_space<vmem>>, vector<8x32xf32>
    %2 = vector.shape_cast %1 : vector<8x32xf32> to vector<8x1x32xf32>
    %3 = vector.broadcast %2 : vector<8x1x32xf32> to vector<8x2x32xf32>
    %4 = arith.addf %0, %3 : vector<8x2x32xf32>
    %c0_4 = arith.constant 0 : index
    %c0_5 = arith.constant 0 : index
    %c0_6 = arith.constant 0 : index
    %5 = vector.load %arg3[%c0_4, %c0_5, %c0_6] : memref<8x2x32xf32, #tpu.memory_space<vmem>>, vector<8x2x32xf32>
    tpu.vector_store %arg3[%c0_4, %c0_5, %c0_6], %4 {strides = array<i32>} : memref<8x2x32xf32, #tpu.memory_space<vmem>>, vector<8x2x32xf32>,
    return
  }
  func.func @transform_0(%arg0: i32) -> (i32, i32, i32) {
    %c0_i32 = arith.constant 0 : i32
    %c0_i32_0 = arith.constant 0 : i32
    %c0_i32_1 = arith.constant 0 : i32
    return %arg0, %c0_i32, %c0_i32_0 : i32, i32, i32
  }
  func.func @transform_1(%arg0: i32) -> (i32, i32) {
    %c0_i32 = arith.constant 0 : i32
    %c0_i32_0 = arith.constant 0 : i32
    return %arg0, %c0_i32 : i32, i32
  }
  func.func @transform_2(%arg0: i32) -> (i32, i32, i32) {
    %c0_i32 = arith.constant 0 : i32
    %c0_i32_0 = arith.constant 0 : i32
    %c0_i32_1 = arith.constant 0 : i32
    return %arg0, %c0_i32, %c0_i32_0 : i32, i32, i32
  }
}

</mosaic_0001>

<llo_original>
// kernel: tpu_custom_call.1
$region0: #{tpu_custom_call.1}
  #allocation0 [shape = 'u32[]', space=smem, size = 0x4, offset = 0x4, fixed_abs, tag = 'smem constant byte address 0x4 - core index']
  #allocation1 [shape = 'u32[144,128]{1,0:T(1,128)}', space=vmem, size = 0x12000, scoped, tag = 'internal scratch']
  %s0 = inlined_call_operand.hbm [shape: f32[8,2,32], index: 0, kind: input, shape index: {}]
  %s1 = inlined_call_operand.hbm [shape: f32[8,32], index: 1, kind: input, shape index: {}]
  %s2 = inlined_call_operand.hbm [shape: f32[8,2,32], index: 2, kind: output, shape index: {}]
  %s3 = sld [smem:[#allocation0]]
  $region26: #{tpu_custom_call.1} parent=0
    _
  %s5 = ssub.s32 1, %s3
  %s6 = scalar_select 0, %s5, %s3
  $region1: #{tpu_custom_call.1} parent=0
    #allocation2 [shape = 'u8[8192]{0}', space=vmem, size = 0x2000, scoped, tag = 'input window, operand 0, single buffered']
    #allocation3 [shape = 's32[1]{0}', space=sflag, size = 0x4, scoped, tag = 'scoped memory for tpu_custom_call.1']
    #allocation4 [shape = 's32[1]{0}', space=sflag, size = 0x4, scoped, tag = 'scoped memory for tpu_custom_call.1']
    #allocation5 [shape = 'u8[4096]{0}', space=vmem, size = 0x1000, scoped, tag = 'input window, operand 1, single buffered']
    #allocation6 [shape = 's32[1]{0}', space=sflag, size = 0x4, scoped, tag = 'scoped memory for tpu_custom_call.1']
    #allocation7 [shape = 'u8[8192]{0}', space=vmem, size = 0x2000, scoped, tag = 'output window, operand 0, single buffered']
    %7 = vsyncpa [#allocation3], 0
    %8 = vsyncpa [#allocation6], 0
    %9 = vsyncpa [#allocation4], 0
    // Predicated region
    $region2: #{tpu_custom_call.1} parent=1 // pred_check
      _
    $region3: #{tpu_custom_call.1} parent=1 // pred_check_branch
      %11 = sbr.rel (0) target = $region5
    $region4: #{tpu_custom_call.1} parent=1 // pred_region
      %s13 = ssub.s32 256, 256
      %14 = vsyncadd [#allocation3], %s13
      %s15 = sshll.u32 [#allocation2], 4
      %s16 = int_to_ptr.vmem [resolvable:$true] %s15
      %21 = dma.hbm_to_vmem [thread:$0]  %s0, 256, %s16, [#allocation3], 32, 32, 2
    $region5: #{tpu_custom_call.1} parent=1 // pred_fallthru
      _
    // Predicated region
    $region6: #{tpu_custom_call.1} parent=1 // pred_check
      _
    $region7: #{tpu_custom_call.1} parent=1 // pred_check_branch
      %23 = sbr.rel (0) target = $region9
    $region8: #{tpu_custom_call.1} parent=1 // pred_region
      %s25 = ssub.s32 128, 128
      %26 = vsyncadd [#allocation6], %s25
      %s28 = sshll.u32 [#allocation5], 4
      %s29 = int_to_ptr.vmem [resolvable:$true] %s28
      %31 = dma.hbm_to_vmem [thread:$0]  %s1, 128, %s29, [#allocation6]
    $region9: #{tpu_custom_call.1} parent=1 // pred_fallthru
      _
    // Predicated region
    $region10: #{tpu_custom_call.1} parent=1 // pred_check
      _
    $region11: #{tpu_custom_call.1} parent=1 // pred_check_branch
      %33 = sbr.rel (0) target = $region13
    $region12: #{tpu_custom_call.1} parent=1 // pred_region
      %34 = dma.done [#allocation3], 256
    $region13: #{tpu_custom_call.1} parent=1 // pred_fallthru
      _
    // Predicated region
    $region14: #{tpu_custom_call.1} parent=1 // pred_check
      _
    $region15: #{tpu_custom_call.1} parent=1 // pred_check_branch
      %36 = sbr.rel (0) target = $region17
    $region16: #{tpu_custom_call.1} parent=1 // pred_region
      %37 = dma.done [#allocation6], 128
    $region17: #{tpu_custom_call.1} parent=1 // pred_fallthru
      _
    %v38 = vld [vmem:[#allocation2] sm:$0x3]
    %v39 = vld [vmem:[#allocation2 + $0x2] sm:$0x3]
    %v40 = vld [vmem:[#allocation2 + $0x4] sm:$0x3]
    %v41 = vld [vmem:[#allocation2 + $0x6] sm:$0x3]
    %v42 = vld [vmem:[#allocation2 + $0x8] sm:$0x3]
    %v43 = vld [vmem:[#allocation2 + $0xa] sm:$0x3]
    %v44 = vld [vmem:[#allocation2 + $0xc] sm:$0x3]
    %v45 = vld [vmem:[#allocation2 + $0xe] sm:$0x3]
    %v46 = vld [vmem:[#allocation5] sm:$0xff]
    %v48 = vcombine.high %v46, %v46
    %v50 = vunpack.c.l.s4 1966171168
    %v51 = vunpack.c.0.s8 %v50
    %v52 = vlaneseq
    %v53 = vshrl.u32 %v52, 7
    %v54 = vsub.s32 %v51, %v53
    %v55 = vrot.slane %v46, %v54
    %v57 = vunpack.c.l.s4 1966171168
    %v58 = vunpack.c.0.s8 %v57
    %v59 = vlaneseq
    %v60 = vshrl.u32 %v59, 7
    %v61 = vsub.s32 %v58, %v60
    %v62 = vrot.slane %v48, %v61
    %v63 = vcombine.high %v55, %v55
    %v64 = vcombine.high %v62, %v62
    %v66 = vunpack.c.l.s4 1966171168
    %v67 = vunpack.c.0.s8 %v66
    %v68 = vlaneseq
    %v69 = vshrl.u32 %v68, 7
    %v70 = vsub.s32 %v67, %v69
    %v71 = vrot.slane %v55, %v70
    %v73 = vunpack.c.l.s4 1966171168
    %v74 = vunpack.c.0.s8 %v73
    %v75 = vlaneseq
    %v76 = vshrl.u32 %v75, 7
    %v77 = vsub.s32 %v74, %v76
    %v78 = vrot.slane %v62, %v77
    %v80 = vunpack.c.l.s4 1966171168
    %v81 = vunpack.c.0.s8 %v80
    %v82 = vlaneseq
    %v83 = vshrl.u32 %v82, 7
    %v84 = vsub.s32 %v81, %v83
    %v85 = vrot.slane %v63, %v84
    %v87 = vunpack.c.l.s4 1966171168
    %v88 = vunpack.c.0.s8 %v87
    %v89 = vlaneseq
    %v90 = vshrl.u32 %v89, 7
    %v91 = vsub.s32 %v88, %v90
    %v92 = vrot.slane %v64, %v91
    %v93 = vcombine.high %v71, %v71
    %v94 = vcombine.high %v78, %v78
    %v95 = vcombine.high %v85, %v85
    %v96 = vcombine.high %v92, %v92
    %v97 = vlaneseq
    %v98 = vshrl.u32 %v97, 7
    %v99 = vsub.s32 0, %v98
    %v100 = vrot.slane %v71, %v99
    %v101 = vlaneseq
    %v102 = vshrl.u32 %v101, 7
    %v103 = vsub.s32 0, %v102
    %v104 = vrot.slane %v85, %v103
    %v105 = vlaneseq
    %v106 = vshrl.u32 %v105, 7
    %v107 = vsub.s32 0, %v106
    %v108 = vrot.slane %v93, %v107
    %v109 = vlaneseq
    %v110 = vshrl.u32 %v109, 7
    %v111 = vsub.s32 0, %v110
    %v112 = vrot.slane %v95, %v111
    %v113 = vlaneseq
    %v114 = vshrl.u32 %v113, 7
    %v115 = vsub.s32 0, %v114
    %v116 = vrot.slane %v78, %v115
    %v117 = vlaneseq
    %v118 = vshrl.u32 %v117, 7
    %v119 = vsub.s32 0, %v118
    %v120 = vrot.slane %v92, %v119
    %v121 = vlaneseq
    %v122 = vshrl.u32 %v121, 7
    %v123 = vsub.s32 0, %v122
    %v124 = vrot.slane %v94, %v123
    %v125 = vlaneseq
    %v126 = vshrl.u32 %v125, 7
    %v127 = vsub.s32 0, %v126
    %v128 = vrot.slane %v96, %v127
    %v137 = vadd.f32 %v38, %v100
    %v138 = vadd.f32 %v39, %v104
    %v139 = vadd.f32 %v40, %v108
    %v140 = vadd.f32 %v41, %v112
    %v141 = vadd.f32 %v42, %v116
    %v142 = vadd.f32 %v43, %v120
    %v143 = vadd.f32 %v44, %v124
    %v144 = vadd.f32 %v45, %v128
    %vm145 = vcmask 254976
    %146 = vst.msk [vmem:[#allocation7] sm:$0x3] %vm145, %v137
    %147 = vst.msk [vmem:[#allocation7 + $0x2] sm:$0x3] %vm145, %v138
    %148 = vst.msk [vmem:[#allocation7 + $0x4] sm:$0x3] %vm145, %v139
    %149 = vst.msk [vmem:[#allocation7 + $0x6] sm:$0x3] %vm145, %v140
    %150 = vst.msk [vmem:[#allocation7 + $0x8] sm:$0x3] %vm145, %v141
    %151 = vst.msk [vmem:[#allocation7 + $0xa] sm:$0x3] %vm145, %v142
    %152 = vst.msk [vmem:[#allocation7 + $0xc] sm:$0x3] %vm145, %v143
    %153 = vst.msk [vmem:[#allocation7 + $0xe] sm:$0x3] %vm145, %v144
    // Predicated region
    $region18: #{tpu_custom_call.1} parent=1 // pred_check
      _
    $region19: #{tpu_custom_call.1} parent=1 // pred_check_branch
      %155 = sbr.rel (0) target = $region21
    $region20: #{tpu_custom_call.1} parent=1 // pred_region
      %s157 = ssub.s32 256, 256
      %158 = vsyncadd [#allocation4], %s157
      %s159 = sshll.u32 [#allocation7], 4
      %s160 = int_to_ptr.vmem [resolvable:$true] %s159
      %165 = dma.vmem_to_hbm [thread:$0]  %s160, 256, %s2, [#allocation4], 32, 32, 2
    $region21: #{tpu_custom_call.1} parent=1 // pred_fallthru
      _
    // Predicated region
    $region22: #{tpu_custom_call.1} parent=1 // pred_check
      _
    $region23: #{tpu_custom_call.1} parent=1 // pred_check_branch
      %167 = sbr.rel (0) target = $region25
    $region24: #{tpu_custom_call.1} parent=1 // pred_region
      %168 = dma.done [#allocation4], 256
    $region25: #{tpu_custom_call.1} parent=1 // pred_fallthru
      _
    %169 = vsyncpa [#allocation3], 1
    %170 = vsyncpa [#allocation6], 1
    %171 = vsyncpa [#allocation4], 1

</llo_original>
